<compile_context>
chip_gen: v7x
topology: tpu7x:2x2x1
jax: 0.10.0
libtpu: 0.0.40
codegen_flags: <defaults>
</compile_context>

<pallas_src>
import functools

import jax
import jax.numpy as jnp
from jax.experimental import pallas as pl
from jax.experimental.pallas import tpu as pltpu

_OFF = 8  # aligned sublane offset where per-channel sums land in the conv scratch


# ---------------------------------------------------------------------------
# VMEM budget (generation-aware)
# ---------------------------------------------------------------------------
@functools.lru_cache(maxsize=None)
def _vmem_limit_bytes():
    cap = 64 << 20  # conservative default = v7x physical VMEM per TC
    try:
        info = pltpu.get_tpu_info()
        cap = int(getattr(info, "vmem_capacity_bytes", cap))
    except Exception:
        pass
    # Leave headroom for Mosaic-internal scratch; 96 MiB on v5e/v6e (128 MiB
    # physical), 48 MiB on v7x (64 MiB physical).
    return int(min(cap * 3 // 4, 100 << 20))


def _round_up(v, m):
    return (v + m - 1) // m * m


def _pick_tile(hw, per_block_bytes, bytes_per_lane):
    """Largest lane-dense (multiple-of-128) spatial tile within the byte budget,
    preferring a tile that divides hw exactly (unmasked edge stores)."""
    budget = max(128, (per_block_bytes // max(1, bytes_per_lane)) // 128 * 128)
    t = min(budget, _round_up(hw, 128))
    if hw % 128 == 0:
        cand = min(budget, hw)
        cand -= cand % 128
        for _ in range(64):  # bounded trace-time divisor search
            if cand < 128:
                break
            if hw % cand == 0:
                return cand
            cand -= 128
    return t


# ---------------------------------------------------------------------------
# Fused single-pass kernel: pool + channel conv + sigmoid + scale. Grid = (N,)
# ---------------------------------------------------------------------------
def _fused_kernel(w_ref, x_ref, out_ref, spad_ref, *, C, k, pad):
    # Per-channel spatial sums for this batch element: (1, C, 1) f32.
    s = jnp.sum(x_ref[...].astype(jnp.float32), axis=2, keepdims=True)

    # Zero-padded channel buffer built via an aligned scratch write (avoids any
    # in-kernel pad/concatenate lowering).
    spad_ref[...] = jnp.zeros_like(spad_ref)
    spad_ref[:, _OFF:_OFF + C, :] = s

    # 1-D cross-correlation over channels; taps already folded with 1/(H*W).
    base = _OFF - pad
    a = w_ref[0] * spad_ref[:, base:base + C, :]
    for t in range(1, k):
        a = a + w_ref[t] * spad_ref[:, base + t:base + t + C, :]
    a = jax.nn.sigmoid(a)                                   # (1, C, 1) f32 gate

    out_ref[...] = (x_ref[...] * a).astype(out_ref.dtype)


# ---------------------------------------------------------------------------
# Fallback pass A: global spatial sums.  Grid = (N, n_hw_tiles)
# ---------------------------------------------------------------------------
def _pool_kernel(x_ref, sum_ref, *, t_hw, hw):
    j = pl.program_id(1)
    n_j = pl.num_programs(1)

    @pl.when(j == 0)
    def _():
        sum_ref[...] = jnp.zeros_like(sum_ref)

    if hw % t_hw == 0:
        sum_ref[...] += jnp.sum(x_ref[...].astype(jnp.float32), axis=2,
                                keepdims=True)
    else:
        # Only the last (partial) tile pays for the iota/compare/select.
        @pl.when(j < n_j - 1)
        def _():
            sum_ref[...] += jnp.sum(x_ref[...].astype(jnp.float32), axis=2,
                                    keepdims=True)

        @pl.when(j == n_j - 1)
        def _():
            xt = x_ref[...].astype(jnp.float32)
            lane = jax.lax.broadcasted_iota(jnp.int32, xt.shape, 2)
            xt = jnp.where(j * t_hw + lane < hw, xt, 0.0)
            sum_ref[...] += jnp.sum(xt, axis=2, keepdims=True)


# ---------------------------------------------------------------------------
# Fallback pass B: out = x * gate (gate precomputed per (n, c) in the wrapper)
# ---------------------------------------------------------------------------
def _scale_kernel(gate_ref, x_ref, out_ref):
    # A partial final spatial tile relies on edge-block semantics: out-of-range
    # lanes read garbage but are never written back to HBM.
    out_ref[...] = (x_ref[...] * gate_ref[...]).astype(out_ref.dtype)


# ---------------------------------------------------------------------------
# Wrapper
# ---------------------------------------------------------------------------
@functools.partial(jax.jit, static_argnames=("t_hw",))
def eca_forward(x, conv_w, t_hw=None):
    """x: (N, C, H, W); conv_w: (k,) = PyTorch Conv1d weight[0, 0, :].

    t_hw=None -> automatic (fused single pass when the slab fits VMEM,
    otherwise a streamed two-pass). Passing an explicit t_hw forces the
    two-pass path with that spatial tile (used for testing)."""
    N, C, H, W = x.shape
    HW = H * W
    k = int(conv_w.shape[0])
    pad = (k - 1) // 2
    assert pad <= _OFF, "kernel sizes up to 17 supported"
    itemsize = x.dtype.itemsize
    vmem_limit = _vmem_limit_bytes()

    xr = x.reshape(N, C, HW)  # free NCHW view: channels->sublanes, pixels->lanes
    w32 = conv_w.astype(jnp.float32)

    # ---- fused single-pass path (x read once, written once) ----------------
    slab = C * HW * itemsize
    extra = 0 if x.dtype == jnp.float32 else C * HW * 4  # possible f32 temp
    fused_live = 4 * slab + extra                        # in x2 + out x2 buffers
    if t_hw is None and fused_live + (2 << 20) <= vmem_limit:
        out = pl.pallas_call(
            functools.partial(_fused_kernel, C=C, k=k, pad=pad),
            out_shape=jax.ShapeDtypeStruct((N, C, HW), x.dtype),
            grid_spec=pltpu.PrefetchScalarGridSpec(
                num_scalar_prefetch=0,
                grid=(N,),
                in_specs=[
                    pl.BlockSpec(memory_space=pltpu.MemorySpace.SMEM),  # taps
                    pl.BlockSpec((1, C, HW), lambda n: (n, 0, 0)),      # x slab
                ],
                out_specs=pl.BlockSpec((1, C, HW), lambda n: (n, 0, 0)),
                scratch_shapes=[pltpu.VMEM((1, _OFF + C + 8, 1), jnp.float32)],
            ),
            compiler_params=pltpu.CompilerParams(
                dimension_semantics=("parallel",),
                vmem_limit_bytes=vmem_limit),
        )(w32 / HW, xr)
        return out.reshape(N, C, H, W)

    # ---- two-pass streaming path (slab does not fit VMEM) -------------------
    if t_hw is None:
        # Pass B holds ~4 live blocks (x + out, double buffered) plus temps.
        t_hw = _pick_tile(HW, vmem_limit // 6, C * itemsize)
    n_hw = pl.cdiv(HW, t_hw)

    # Pass A: per-channel spatial sums (reads x once).
    # Note: for v7x small-batch inference the HW axis could additionally be
    # split into independent halves to occupy both TensorCores.
    sums = pl.pallas_call(
        functools.partial(_pool_kernel, t_hw=t_hw, hw=HW),
        out_shape=jax.ShapeDtypeStruct((N, C, 1), jnp.float32),
        grid_spec=pltpu.PrefetchScalarGridSpec(
            num_scalar_prefetch=0,
            grid=(N, n_hw),
            in_specs=[pl.BlockSpec((1, C, t_hw), lambda n, j: (n, 0, j))],
            out_specs=pl.BlockSpec((1, C, 1), lambda n, j: (n, 0, 0)),
        ),
        compiler_params=pltpu.CompilerParams(
            dimension_semantics=("parallel", "arbitrary"),
            vmem_limit_bytes=vmem_limit),
    )(xr)

    # Tiny (N, C) gate in plain JAX: mean -> channel conv -> sigmoid.
    mean = sums[:, :, 0] * (1.0 / HW)                        # (N, C) f32
    meanp = jnp.pad(mean, ((0, 0), (pad, pad)))
    z = sum(w32[t] * meanp[:, t:t + C] for t in range(k))    # cross-correlation
    gate = jax.nn.sigmoid(z)[:, :, None]                     # (N, C, 1) f32

    # Pass B: pure stream out = x * gate (reads x once, writes once).
    out = pl.pallas_call(
        _scale_kernel,
        out_shape=jax.ShapeDtypeStruct((N, C, HW), x.dtype),
        grid_spec=pltpu.PrefetchScalarGridSpec(
            num_scalar_prefetch=0,
            grid=(N, n_hw),
            in_specs=[
                pl.BlockSpec((1, C, 1), lambda n, j: (n, 0, 0)),     # gate
                pl.BlockSpec((1, C, t_hw), lambda n, j: (n, 0, j)),  # x
            ],
            out_specs=pl.BlockSpec((1, C, t_hw), lambda n, j: (n, 0, j)),
        ),
        compiler_params=pltpu.CompilerParams(
            dimension_semantics=("parallel", "parallel"),
            vmem_limit_bytes=vmem_limit),
    )(gate, xr)

    return out.reshape(N, C, H, W)


# ---------------------------------------------------------------------------
# Pure-JAX reference (same math, no Pallas)
# ---------------------------------------------------------------------------
def eca_reference(x, conv_w):
    N, C, H, W = x.shape
    k = conv_w.shape[0]
    pad = (k - 1) // 2
    y = jnp.mean(x.astype(jnp.float32), axis=(2, 3))          # (N, C)
    yp = jnp.pad(y, ((0, 0), (pad, pad)))
    z = sum(conv_w[t] * yp[:, t:t + C] for t in range(k))     # cross-correlation
    a = jax.nn.sigmoid(z)
    return (x * a[:, :, None, None]).astype(x.dtype)


if __name__ == "__main__":
    key = jax.random.PRNGKey(0)
    kx, kw, kx2, kx3 = jax.random.split(key, 4)

    # eca_layer(channel=4, k_size=3) on x of shape (2, 4, 16, 16): fused path.
    N, C, H, W, K = 2, 4, 16, 16, 3
    x = jax.random.normal(kx, (N, C, H, W), jnp.float32)
    conv_w = jax.random.normal(kw, (K,), jnp.float32) * 0.5   # Conv1d weight[0,0,:]

    out = jax.block_until_ready(eca_forward(x, conv_w))
    ref = eca_reference(x, conv_w)
    assert out.shape == x.shape
    assert jnp.allclose(out, ref, atol=1e-5, rtol=1e-5), "mismatch (fused path)"

    # Forced two-pass path, H*W (=400) not a multiple of the tile: exercises the
    # masked tail in pass A and edge blocks in pass B.
    x2 = jax.random.normal(kx2, (2, 8, 20, 20), jnp.float32)
    out2 = jax.block_until_ready(eca_forward(x2, conv_w, t_hw=128))
    ref2 = eca_reference(x2, conv_w)
    assert jnp.allclose(out2, ref2, atol=1e-5, rtol=1e-5), "mismatch (masked tail)"

    # Forced two-pass path with a tile that divides H*W (=256): no tail mask.
    x3 = jax.random.normal(kx3, (1, 8, 16, 16), jnp.float32)
    out3 = jax.block_until_ready(eca_forward(x3, conv_w, t_hw=128))
    ref3 = eca_reference(x3, conv_w)
    assert jnp.allclose(out3, ref3, atol=1e-5, rtol=1e-5), "mismatch (exact tiles)"

    print("KERNEL_OK")
</pallas_src>

<mosaic_0001>
module attributes {stable_mosaic.version = 11 : i64} {
  func.func @_fused_kernel(%arg0: i32, %arg1: memref<3xf32, #tpu.memory_space<smem>>, %arg2: memref<1x4x256xf32, #tpu.memory_space<vmem>>, %arg3: memref<1x4x256xf32, #tpu.memory_space<vmem>>, %arg4: memref<1x20x1xf32, #tpu.memory_space<vmem>>) attributes {dimension_semantics = [#tpu.dimension_semantics<parallel>], iteration_bounds = array<i64: 2>, scalar_prefetch = 0 : i64, scratch_operands = 1 : i64, tpu.core_type = #tpu.core_type<tc>, window_params = [{transform_indices = @transform_0, window_bounds = array<i64: 3>}, {transform_indices = @transform_1, window_bounds = array<i64: 1, 4, 256>}, {transform_indices = @transform_2, window_bounds = array<i64: 1, 4, 256>}]} {
    %c0 = arith.constant 0 : index
    %c0_0 = arith.constant 0 : index
    %c0_1 = arith.constant 0 : index
    %0 = vector.load %arg2[%c0, %c0_0, %c0_1] : memref<1x4x256xf32, #tpu.memory_space<vmem>>, vector<1x4x256xf32>
    %cst = arith.constant dense<0.000000e+00> : vector<1x4xf32>
    %1 = vector.multi_reduction <add>, %0, %cst [2] : vector<1x4x256xf32> to vector<1x4xf32>
    %2 = vector.shape_cast %1 : vector<1x4xf32> to vector<1x4x1xf32>
    %cst_2 = arith.constant 0.000000e+00 : f32
    %3 = vector.broadcast %cst_2 : f32 to vector<1x20x1xf32>
    %c0_3 = arith.constant 0 : index
    %c0_4 = arith.constant 0 : index
    %c0_5 = arith.constant 0 : index
    %4 = vector.load %arg4[%c0_3, %c0_4, %c0_5] : memref<1x20x1xf32, #tpu.memory_space<vmem>>, vector<1x20x1xf32>
    tpu.vector_store %arg4[%c0_3, %c0_4, %c0_5], %3 {strides = array<i32>} : memref<1x20x1xf32, #tpu.memory_space<vmem>>, vector<1x20x1xf32>,
    %c0_6 = arith.constant 0 : index
    %c8 = arith.constant 8 : index
    %c0_7 = arith.constant 0 : index
    %5 = vector.load %arg4[%c0_6, %c8, %c0_7] : memref<1x20x1xf32, #tpu.memory_space<vmem>>, vector<1x4x1xf32>
    tpu.vector_store %arg4[%c0_6, %c8, %c0_7], %2 {strides = array<i32>} : memref<1x20x1xf32, #tpu.memory_space<vmem>>, vector<1x4x1xf32>,
    %c0_8 = arith.constant 0 : index
    %6 = memref.load %arg1[%c0_8] : memref<3xf32, #tpu.memory_space<smem>>
    %c0_9 = arith.constant 0 : index
    %c7 = arith.constant 7 : index
    %c0_10 = arith.constant 0 : index
    %7 = vector.load %arg4[%c0_9, %c7, %c0_10] : memref<1x20x1xf32, #tpu.memory_space<vmem>>, vector<1x4x1xf32>
    %8 = vector.broadcast %6 : f32 to vector<1x4x1xf32>
    %9 = arith.mulf %8, %7 : vector<1x4x1xf32>
    %c1 = arith.constant 1 : index
    %10 = memref.load %arg1[%c1] : memref<3xf32, #tpu.memory_space<smem>>
    %c0_11 = arith.constant 0 : index
    %c8_12 = arith.constant 8 : index
    %c0_13 = arith.constant 0 : index
    %11 = vector.load %arg4[%c0_11, %c8_12, %c0_13] : memref<1x20x1xf32, #tpu.memory_space<vmem>>, vector<1x4x1xf32>
    %12 = vector.broadcast %10 : f32 to vector<1x4x1xf32>
    %13 = arith.mulf %12, %11 : vector<1x4x1xf32>
    %14 = arith.addf %9, %13 : vector<1x4x1xf32>
    %c2 = arith.constant 2 : index
    %15 = memref.load %arg1[%c2] : memref<3xf32, #tpu.memory_space<smem>>
    %c0_14 = arith.constant 0 : index
    %c9 = arith.constant 9 : index
    %c0_15 = arith.constant 0 : index
    %16 = vector.load %arg4[%c0_14, %c9, %c0_15] : memref<1x20x1xf32, #tpu.memory_space<vmem>>, vector<1x4x1xf32>
    %17 = vector.broadcast %15 : f32 to vector<1x4x1xf32>
    %18 = arith.mulf %17, %16 : vector<1x4x1xf32>
    %19 = arith.addf %14, %18 : vector<1x4x1xf32>
    %20 = arith.negf %19 : vector<1x4x1xf32>
    %21 = math.exp %20 : vector<1x4x1xf32>
    %cst_16 = arith.constant 1.000000e+00 : f32
    %22 = vector.broadcast %cst_16 : f32 to vector<1x4x1xf32>
    %23 = arith.addf %22, %21 : vector<1x4x1xf32>
    %24 = arith.divf %22, %23 : vector<1x4x1xf32>
    %c0_17 = arith.constant 0 : index
    %c0_18 = arith.constant 0 : index
    %c0_19 = arith.constant 0 : index
    %25 = vector.load %arg2[%c0_17, %c0_18, %c0_19] : memref<1x4x256xf32, #tpu.memory_space<vmem>>, vector<1x4x256xf32>
    %26 = vector.broadcast %24 : vector<1x4x1xf32> to vector<1x4x256xf32>
    %27 = arith.mulf %25, %26 : vector<1x4x256xf32>
    %c0_20 = arith.constant 0 : index
    %c0_21 = arith.constant 0 : index
    %c0_22 = arith.constant 0 : index
    %28 = vector.load %arg3[%c0_20, %c0_21, %c0_22] : memref<1x4x256xf32, #tpu.memory_space<vmem>>, vector<1x4x256xf32>
    tpu.vector_store %arg3[%c0_20, %c0_21, %c0_22], %27 {strides = array<i32>} : memref<1x4x256xf32, #tpu.memory_space<vmem>>, vector<1x4x256xf32>,
    return
  }
  func.func @transform_0(%arg0: i32) -> i32 {
    %c0_i32 = arith.constant 0 : i32
    %c0_i32_0 = arith.constant 0 : i32
    return %c0_i32 : i32
  }
  func.func @transform_1(%arg0: i32) -> (i32, i32, i32) {
    %c0_i32 = arith.constant 0 : i32
    %c0_i32_0 = arith.constant 0 : i32
    %c0_i32_1 = arith.constant 0 : i32
    return %arg0, %c0_i32, %c0_i32_0 : i32, i32, i32
  }
  func.func @transform_2(%arg0: i32) -> (i32, i32, i32) {
    %c0_i32 = arith.constant 0 : i32
    %c0_i32_0 = arith.constant 0 : i32
    %c0_i32_1 = arith.constant 0 : i32
    return %arg0, %c0_i32, %c0_i32_0 : i32, i32, i32
  }
}

</mosaic_0001>

<llo_original>
// kernel: eca_forward.1
$region0: #{eca_forward.1}
  #allocation0 [shape = 'u32[]', space=smem, size = 0x4, offset = 0x4, fixed_abs, tag = 'smem constant byte address 0x4 - core index']
  #allocation1 [shape = 'u32[144,128]{1,0:T(1,128)}', space=vmem, size = 0x12000, scoped, tag = 'internal scratch']
  #allocation2 [shape = 'f32[1,20,1]{2,1,0:T(8,128)}', space=vmem, size = 0x3000, scoped, tag = 'scratch operand']
  %s0 = inlined_call_operand.vmem [shape: f32[3], index: 0, kind: input, shape index: {}]
  %s1 = inlined_call_operand.vmem [shape: f32[2,4,256], index: 1, kind: input, shape index: {}]
  %s2 = inlined_call_operand.vmem [shape: f32[2,4,256], index: 2, kind: output, shape index: {}]
  %s3 = sld [smem:[#allocation0]]
  $region45: #{eca_forward.1} parent=0
    _
  %s5 = ssub.s32 1, %s3
  %s6 = scalar_select 0, %s5, %s3
  $region1: #{eca_forward.1} parent=0
    #allocation3 [shape = 'u8[512]{0}', space=smem, size = 0x200, scoped, tag = 'input window, operand 0, single buffered']
    #allocation4 [shape = 's32[2]{0}', space=sflag, size = 0x8, scoped, tag = 'scoped memory for eca_forward.1']
    %7 = vsyncpa [#allocation4], 0
    loop: start=0, step=1, limit=4
    $region2: #{eca_forward.1} parent=1 // loop_pre_header
      _
    $region3: #{eca_forward.1} parent=1 // loop_header
      %s9 = sphi 0, %s13
      %p10 = scmp.ge.s32.totalorder %s9, 4
      %s17 = sphi 0, %s17
      %s19 = sphi 0, %s17
      %s20 = sphi 0, %s19
      %s34 = sphi 0, %s20
      %s40 = sphi 0, %s42
      %s43 = sphi 0, %s40
      %s44 = sphi 0, %s43
      %s60 = sphi 0, %s44
      %s66 = sphi 0, %s68
      %s69 = sphi 0, %s66
      %s70 = sphi 0, %s69
      %s86 = sphi 0, %s70
    $region4: #{eca_forward.1} parent=1 // loop_header_branch
      %12 = sbr.rel (%p10) target = $region8
    $region5: #{eca_forward.1} parent=1 // loop_body
      %s14 = ssub.s32 %s9, 1
      %s15 = ssub.s32 %s9, 2
      %s16 = sadd.s32 %s9, 1
      %s18 = sadd.s32 %s17, 1
      %p21 = scmp.eq.s32.totalorder %s9, 1
      %p22 = scmp.ne.s32.totalorder %s17, %s19
      %p23 = scmp.eq.s32.totalorder %s9, 0
      %p24 = por %p22, %p23
      %p25 = scmp.ne.s32.totalorder %s17, %s19
      %p26 = scmp.eq.s32.totalorder %s14, 1
      %p27 = por %p25, %p26
      %p28 = scmp.ne.s32.totalorder %s19, %s20
      %p29 = scmp.eq.s32.totalorder %s14, 0
      %p30 = por %p28, %p29
      %p31 = scmp.ne.s32.totalorder %s19, %s20
      %p32 = scmp.eq.s32.totalorder %s15, 1
      %p33 = por %p31, %p32
      %p35 = scmp.ne.s32.totalorder %s20, %s34
      %p36 = scmp.eq.s32.totalorder %s15, 0
      %p37 = por %p35, %p36
      %s38 = ssub.s32 %s9, %s16
      %p39 = scmp.eq.s32.totalorder %s38, 0
      %s41 = sadd.s32 %s40, 1
      %s42 = scalar_select %p39, %s40, %s41
      %p45 = pneg %p39
      %p46 = scmp.eq.s32.totalorder %s9, 1
      %p47 = por %p45, %p46
      %p48 = scmp.ne.s32.totalorder %s40, %s43
      %p49 = scmp.eq.s32.totalorder %s9, 0
      %p50 = por %p48, %p49
      %p51 = scmp.ne.s32.totalorder %s40, %s43
      %p52 = scmp.eq.s32.totalorder %s14, 1
      %p53 = por %p51, %p52
      %p54 = scmp.ne.s32.totalorder %s43, %s44
      %p55 = scmp.eq.s32.totalorder %s14, 0
      %p56 = por %p54, %p55
      %p57 = scmp.ne.s32.totalorder %s43, %s44
      %p58 = scmp.eq.s32.totalorder %s15, 1
      %p59 = por %p57, %p58
      %p61 = scmp.ne.s32.totalorder %s44, %s60
      %p62 = scmp.eq.s32.totalorder %s15, 0
      %p63 = por %p61, %p62
      %s64 = ssub.s32 %s9, %s16
      %p65 = scmp.eq.s32.totalorder %s64, 0
      %s67 = sadd.s32 %s66, 1
      %s68 = scalar_select %p65, %s66, %s67
      %p71 = pneg %p65
      %p72 = scmp.eq.s32.totalorder %s9, 1
      %p73 = por %p71, %p72
      %p74 = scmp.ne.s32.totalorder %s66, %s69
      %p75 = scmp.eq.s32.totalorder %s9, 0
      %p76 = por %p74, %p75
      %p77 = scmp.ne.s32.totalorder %s66, %s69
      %p78 = scmp.eq.s32.totalorder %s14, 1
      %p79 = por %p77, %p78
      %p80 = scmp.ne.s32.totalorder %s69, %s70
      %p81 = scmp.eq.s32.totalorder %s14, 0
      %p82 = por %p80, %p81
      %p83 = scmp.ne.s32.totalorder %s69, %s70
      %p84 = scmp.eq.s32.totalorder %s15, 1
      %p85 = por %p83, %p84
      %p87 = scmp.ne.s32.totalorder %s70, %s86
      %p88 = scmp.eq.s32.totalorder %s15, 0
      %p89 = por %p87, %p88
      %p90 = scmp.le.s32.totalorder 1, %s9
      %p91 = scmp.lt.s32.totalorder %s9, 3
      %p92 = pnand %p90, %p91
      %p93 = pneg %p92
      // Predicated region
      $region9: #{eca_forward.1} parent=5 // pred_check
        _
      $region10: #{eca_forward.1} parent=5 // pred_check_branch
        %95 = sbr.rel (%p92) target = $region12
      $region11: #{eca_forward.1} parent=5 // pred_region
        %s96 = ssub.s32 %s9, 1
        // Predicated region
        $region13: #{eca_forward.1} parent=11 // pred_check
          %p97 = pneg %p30
        $region14: #{eca_forward.1} parent=11 // pred_check_branch
          %99 = sbr.rel (%p97) target = $region16
        $region15: #{eca_forward.1} parent=11 // pred_region
          %s101 = ssub.s32 16, 16
          %102 = vsyncadd [#allocation4], %s101
          %s104 = sshll.u32 %s0, 4
          %s105 = int_to_ptr.vmem [resolvable:$true] %s104
          %107 = dma.vmem_to_smem %s105, 16, [#allocation3], [#allocation4]
        $region16: #{eca_forward.1} parent=11 // pred_fallthru
          _
      $region12: #{eca_forward.1} parent=5 // pred_fallthru
        _
      %p108 = scmp.lt.s32.totalorder %s9, 2
      // Predicated region
      $region17: #{eca_forward.1} parent=5 // pred_check
        %p109 = pneg %p108
      $region18: #{eca_forward.1} parent=5 // pred_check_branch
        %111 = sbr.rel (%p109) target = $region20
      $region19: #{eca_forward.1} parent=5 // pred_region
        // Predicated region
        $region21: #{eca_forward.1} parent=19 // pred_check
          %p112 = pneg %p50
        $region22: #{eca_forward.1} parent=19 // pred_check_branch
          %114 = sbr.rel (%p112) target = $region24
        $region23: #{eca_forward.1} parent=19 // pred_region
          %p115 = scmp.lt.s32.totalorder %s9, 1
          %s116 = scalar_select %p115, %s9, 1
          %s117 = smul.addr %s116, 2
          %s118 = smul.addr %s117, 4
          %s119 = scalar_lea.vmem %s1, %s118
        $region24: #{eca_forward.1} parent=19 // pred_fallthru
          _
      $region20: #{eca_forward.1} parent=5 // pred_fallthru
        _
      %p120 = scmp.le.s32.totalorder 1, %s9
      %p121 = scmp.lt.s32.totalorder %s9, 3
      %p122 = pnand %p120, %p121
      %p123 = pneg %p122
      // Predicated region
      $region25: #{eca_forward.1} parent=5 // pred_check
        _
      $region26: #{eca_forward.1} parent=5 // pred_check_branch
        %125 = sbr.rel (%p122) target = $region28
      $region27: #{eca_forward.1} parent=5 // pred_region
        %s126 = ssub.s32 %s9, 1
        // Predicated region
        $region29: #{eca_forward.1} parent=27 // pred_check
          %p127 = pneg %p30
        $region30: #{eca_forward.1} parent=27 // pred_check_branch
          %129 = sbr.rel (%p127) target = $region32
        $region31: #{eca_forward.1} parent=27 // pred_region
          %130 = dma.done [#allocation4], 16
        $region32: #{eca_forward.1} parent=27 // pred_fallthru
          _
        %131 = sfence
        %p132 = pneg %p30
        %p133 = pneg %p27
        %p134 = scmp.lt.s32.totalorder %s14, 1
        %s135 = scalar_select %p134, %s14, 1
        %s136 = smul.addr %s135, 2
        %s137 = smul.addr %s136, 4
        %s138 = scalar_lea.vmem %s1, %s137
        %p139 = pneg %p56
        %p140 = pneg %p53
        %p141 = pneg %p82
        %p142 = pneg %p79
        %p143 = scmp.lt.s32.totalorder %s14, 1
        %s144 = scalar_select %p143, %s14, 1
        %s145 = smul.addr %s144, 2
        %s146 = smul.addr %s145, 4
        %s147 = scalar_lea.vmem %s2, %s146
        %p148 = scmp.lt.s32.totalorder %s14, 1
        %s149 = scalar_select %p148, %s14, 1
        %s150 = smul.addr %s149, 2
        %s151 = smul.addr %s150, 4
        %s152 = scalar_lea.vmem %s1, %s151
        %p153 = scmp.lt.s32.totalorder %s14, 1
        %s154 = scalar_select %p153, %s14, 1
        %s155 = smul.addr %s154, 2
        %s156 = smul.addr %s155, 4
        %s157 = scalar_lea.vmem %s2, %s156
        %v158 = vld [vmem:[%s152] sm:$0xff]
        %v160 = vcombine.high %v158, %v158
        %vm162 = vcmask 1043456
        %v163 = vsel %vm162, %v158, 0.0
        %v164 = vsel %vm162, %v160, 0.0
        %v165 = vadd.f32 %v163, %v164
        %166 = vadd.xlane.f32.xlu0 %v165
        %v167 = vpop.xlane.xlu0 %166
        %vm168 = vcmask 7168
        %169 = vst.msk [vmem:[#allocation2] sm:$0xff] %vm168, 0.0
        %170 = vst.msk [vmem:[#allocation2 + $0x8] sm:$0xff] %vm168, 0.0
        %vm171 = vcmask 3072
        %172 = vst.msk [vmem:[#allocation2 + $0x10] sm:$0xf] %vm171, 0.0
        %173 = vst.msk [vmem:[#allocation2 + $0x8] sm:$0xf] %vm171, %v167
        %s174 = sld [smem:[#allocation3]]
        %v175 = vld [vmem:[#allocation2 + $0x7] sm:$0xf]
        %v176 = vstv %s174
        %v177 = vmul.f32 %v176, %v175
        %s178 = sld [smem:[#allocation3 + $0x1]]
        %v179 = vld [vmem:[#allocation2 + $0x8] sm:$0xf]
        %v180 = vstv %s178
        %v181 = vmul.f32 %v180, %v179
        %v182 = vadd.f32 %v177, %v181
        %s183 = sld [smem:[#allocation3 + $0x2]]
        %v184 = vld [vmem:[#allocation2 + $0x9] sm:$0xf]
        %v185 = vstv %s183
        %v186 = vmul.f32 %v185, %v184
        %v187 = vadd.f32 %v182, %v186
        %v188 = vxor.u32 %v187, 2147483648
        %v189 = vmul.f32 %v188, 1.442695
        %v190 = vpow.pop %v189
        %v191 = vadd.f32 %v190, 1.0
        %v192 = vrcp.pop %v191
        %v193 = vmul.f32 1.0, %v192
        %v194 = vld [vmem:[%s152] sm:$0xff]
        %196 = vset.pattern.permute.xlu0 0
        %197 = vperm.xlu0 %196, %v193
        %v198 = vpop.permute.xlu0 %197
        %v200 = vunpack.c.l.s4 839922192
        %v201 = vunpack.c.0.s8 %v200
        %v202 = vlaneseq
        %v203 = vshrl.u32 %v202, 7
        %v204 = vsub.s32 %v201, %v203
        %v205 = vrot.slane %v198, %v204
        %v207 = vmul.f32 %v194, %v205
        %208 = vst [vmem:[%s157] sm:$0xff] %v207
        %p209 = scmp.lt.s32.totalorder %s14, 1
        %s210 = scalar_select %p209, %s14, 1
        %s211 = smul.addr %s210, 2
        %s212 = smul.addr %s211, 4
        %s213 = scalar_lea.vmem %s2, %s212
        // Predicated region
        $region33: #{eca_forward.1} parent=27 // pred_check
          %p214 = pneg %p79
        $region34: #{eca_forward.1} parent=27 // pred_check_branch
          %216 = sbr.rel (%p214) target = $region36
        $region35: #{eca_forward.1} parent=27 // pred_region
          _
        $region36: #{eca_forward.1} parent=27 // pred_fallthru
          _
      $region28: #{eca_forward.1} parent=5 // pred_fallthru
        _
      %p217 = scmp.le.s32.totalorder 2, %s9
      // Predicated region
      $region37: #{eca_forward.1} parent=5 // pred_check
        %p218 = pneg %p217
      $region38: #{eca_forward.1} parent=5 // pred_check_branch
        %220 = sbr.rel (%p218) target = $region40
      $region39: #{eca_forward.1} parent=5 // pred_region
        %s221 = ssub.s32 %s9, 2
        // Predicated region
        $region41: #{eca_forward.1} parent=39 // pred_check
          %p222 = pneg %p85
        $region42: #{eca_forward.1} parent=39 // pred_check_branch
          %224 = sbr.rel (%p222) target = $region44
        $region43: #{eca_forward.1} parent=39 // pred_region
          %p225 = scmp.lt.s32.totalorder %s15, 1
          %s226 = scalar_select %p225, %s15, 1
          %s227 = smul.addr %s226, 2
          %s228 = smul.addr %s227, 4
          %s229 = scalar_lea.vmem %s2, %s228
        $region44: #{eca_forward.1} parent=39 // pred_fallthru
          _
      $region40: #{eca_forward.1} parent=5 // pred_fallthru
        _
    $region6: #{eca_forward.1} parent=1 // loop_footer
      %s13 = sadd.s32 1, %s9
    $region7: #{eca_forward.1} parent=1 // loop_footer_branch
      %8 = sbr.rel target = $region3
    $region8: #{eca_forward.1} parent=1 // loop_exit
      _
    %230 = vsyncpa [#allocation4], 1
    %s231 = scalar_lea.sflag [#allocation4], 1
    %232 = vsyncpa %s231, 1

</llo_original>
